<compile_context>
chip_gen: v7x
topology: tpu7x:2x2x1
jax: 0.10.0
libtpu: 0.0.40
codegen_flags: <defaults>
</compile_context>

<pallas_src>
import jax
import jax.numpy as jnp
import numpy as np
from jax.experimental import pallas as pl
from jax.experimental.pallas import tpu as pltpu


def _make_resblock_kernel(N, C_in, C_out, L, eps=1e-5):
    inv_nl = 1.0 / float(N * L)

    def kernel(x_ref, w1_ref, g1_ref, be1_ref, w2_ref, g2_ref, be2_ref, o_ref):
        # Edge masks along L — built once, reused by both convs.
        lpos = jax.lax.broadcasted_iota(jnp.int32, (1, L), 1)
        is_first = lpos == 0
        is_last = lpos == (L - 1)

        def conv3(h, w_stacked):
            # 'same' conv, k=3, s=1 on (Ch, L): out = W_stacked @ [h[l-1]; h[l]; h[l+1]].
            hm1 = jnp.where(is_first, 0.0, pltpu.roll(h, shift=1, axis=1))       # h[:, l-1]
            hp1 = jnp.where(is_last, 0.0, pltpu.roll(h, shift=L - 1, axis=1))    # h[:, l+1]
            taps = jnp.concatenate([hm1, h, hp1], axis=0)                        # (3*Ch, L)
            return jnp.dot(w_stacked, taps, preferred_element_type=jnp.float32)  # (C_out, L)

        def batchnorm(h_list, gamma, beta):
            # Training-mode BN1d: one-pass biased batch stats over (N, L), then a single
            # per-channel scale/offset FMA. (Conv bias omitted upstream: the mean
            # subtraction here cancels it exactly.)
            s1 = h_list[0]
            s2 = h_list[0] * h_list[0]
            for h in h_list[1:]:
                s1 = s1 + h
                s2 = s2 + h * h
            s1 = jnp.sum(s1, axis=1, keepdims=True)           # (C_out, 1)
            s2 = jnp.sum(s2, axis=1, keepdims=True)
            mean = s1 * inv_nl
            var = s2 * inv_nl - mean * mean
            scale = gamma * jax.lax.rsqrt(var + eps)          # (C_out, 1)
            offset = beta - mean * scale
            return [h * scale + offset for h in h_list]

        x = [x_ref[n] for n in range(N)]                      # each (C_in, L), NCL slice
        w1 = w1_ref[...]
        w2 = w2_ref[...]
        g1, be1 = g1_ref[...], be1_ref[...]
        g2, be2 = g2_ref[...], be2_ref[...]

        h = [conv3(x[n], w1) for n in range(N)]                    # conv1 (stacked-K matmul)
        h = [jnp.maximum(v, 0.0) for v in batchnorm(h, g1, be1)]   # BN1 + ReLU
        h = [conv3(h[n], w2) for n in range(N)]                    # conv2
        h = batchnorm(h, g2, be2)                                  # BN2
        for n in range(N):                                         # residual + ReLU, NCL store
            o_ref[n] = jnp.maximum(h[n] + x[n], 0.0)

    return kernel


@jax.jit
def residual_block(x_ncl, params):
    """x_ncl: (N, C, L) fp32, PyTorch NCL convention (stride=1, downsample=None)."""
    w1, b1, g1, be1, w2, b2, g2, be2 = params
    del b1, b2  # exactly cancelled by the training-mode BN mean subtraction
    N, C_in, L = x_ncl.shape
    C_out = w1.shape[0]

    # Stack the 3 taps into one K = 3*C_in contraction: (C_out, C_in, 3) -> (C_out, 3*C_in).
    w1s = jnp.transpose(w1, (0, 2, 1)).reshape(C_out, 3 * C_in)
    w2s = jnp.transpose(w2, (0, 2, 1)).reshape(C_out, 3 * C_out)
    col = lambda v: v.reshape(-1, 1)  # per-channel BN params as (C, 1) for lane broadcast

    kernel = _make_resblock_kernel(N, C_in, C_out, L)
    return pl.pallas_call(
        kernel,
        out_shape=jax.ShapeDtypeStruct((N, C_out, L), jnp.float32),
        in_specs=[pl.BlockSpec(memory_space=pltpu.MemorySpace.VMEM)] * 7,
        out_specs=pl.BlockSpec(memory_space=pltpu.MemorySpace.VMEM),
    )(x_ncl, w1s, col(g1), col(be1), w2s, col(g2), col(be2))


def reference_forward(x, params):
    """Pure-JAX reference matching PyTorch ResidualBlock.forward (training-mode BN)."""
    w1, b1, g1, be1, w2, b2, g2, be2 = params

    def conv(h, w, b):
        y = jax.lax.conv_general_dilated(
            h, w, window_strides=(1,), padding=((1, 1),),
            dimension_numbers=('NCW', 'OIW', 'NCW'))
        return y + b[None, :, None]

    def bn(h, g, be):
        mean = h.mean(axis=(0, 2), keepdims=True)
        var = h.var(axis=(0, 2), keepdims=True)   # biased, like PyTorch BN normalization
        return (h - mean) / jnp.sqrt(var + 1e-5) * g[None, :, None] + be[None, :, None]

    h = jax.nn.relu(bn(conv(x, w1, b1), g1, be1))
    h = bn(conv(h, w2, b2), g2, be2)
    return jax.nn.relu(h + x)


def make_params(key, c_in, c_out):
    ks = jax.random.split(key, 4)
    bound1 = 1.0 / np.sqrt(c_in * 3)
    bound2 = 1.0 / np.sqrt(c_out * 3)
    w1 = jax.random.uniform(ks[0], (c_out, c_in, 3), jnp.float32, -bound1, bound1)
    b1 = jax.random.uniform(ks[1], (c_out,), jnp.float32, -bound1, bound1)
    w2 = jax.random.uniform(ks[2], (c_out, c_out, 3), jnp.float32, -bound2, bound2)
    b2 = jax.random.uniform(ks[3], (c_out,), jnp.float32, -bound2, bound2)
    g1 = jnp.ones((c_out,), jnp.float32)
    be1 = jnp.zeros((c_out,), jnp.float32)
    g2 = jnp.ones((c_out,), jnp.float32)
    be2 = jnp.zeros((c_out,), jnp.float32)
    return (w1, b1, g1, be1, w2, b2, g2, be2)


if __name__ == "__main__":
    N, C, L = 2, 8, 16          # in_channels == out_channels, stride=1, downsample=None
    root = jax.random.PRNGKey(0)
    kx, kp = jax.random.split(root)
    x = jax.random.normal(kx, (N, C, L), jnp.float32)
    params = make_params(kp, C, C)

    out = jax.block_until_ready(residual_block(x, params))
    ref = jax.block_until_ready(reference_forward(x, params))
    np.testing.assert_allclose(np.asarray(out), np.asarray(ref), rtol=1e-3, atol=1e-3)

    print("KERNEL_OK")
</pallas_src>

<mosaic_0001>
module attributes {stable_mosaic.version = 11 : i64} {
  func.func @kernel(%arg0: memref<2x8x16xf32, #tpu.memory_space<vmem>>, %arg1: memref<8x24xf32, #tpu.memory_space<vmem>>, %arg2: memref<8x1xf32, #tpu.memory_space<vmem>>, %arg3: memref<8x1xf32, #tpu.memory_space<vmem>>, %arg4: memref<8x24xf32, #tpu.memory_space<vmem>>, %arg5: memref<8x1xf32, #tpu.memory_space<vmem>>, %arg6: memref<8x1xf32, #tpu.memory_space<vmem>>, %arg7: memref<2x8x16xf32, #tpu.memory_space<vmem>>) attributes {dimension_semantics = [], scalar_prefetch = 0 : i64, scratch_operands = 0 : i64, tpu.core_type = #tpu.core_type<tc>} {
    %0 = tpu.iota {dimensions = array<i32: 1>} : vector<1x16xi32>
    %c0_i32 = arith.constant 0 : i32
    %1 = vector.broadcast %c0_i32 : i32 to vector<1x16xi32>
    %2 = arith.cmpi eq, %0, %1 : vector<1x16xi32>
    %c15_i32 = arith.constant 15 : i32
    %3 = vector.broadcast %c15_i32 : i32 to vector<1x16xi32>
    %4 = arith.cmpi eq, %0, %3 : vector<1x16xi32>
    %c0 = arith.constant 0 : index
    %c0_0 = arith.constant 0 : index
    %c0_1 = arith.constant 0 : index
    %5 = vector.load %arg0[%c0, %c0_0, %c0_1] : memref<2x8x16xf32, #tpu.memory_space<vmem>>, vector<1x8x16xf32>
    %6 = vector.shape_cast %5 : vector<1x8x16xf32> to vector<8x16xf32>
    %c1 = arith.constant 1 : index
    %c0_2 = arith.constant 0 : index
    %c0_3 = arith.constant 0 : index
    %7 = vector.load %arg0[%c1, %c0_2, %c0_3] : memref<2x8x16xf32, #tpu.memory_space<vmem>>, vector<1x8x16xf32>
    %8 = vector.shape_cast %7 : vector<1x8x16xf32> to vector<8x16xf32>
    %c0_4 = arith.constant 0 : index
    %c0_5 = arith.constant 0 : index
    %9 = vector.load %arg1[%c0_4, %c0_5] : memref<8x24xf32, #tpu.memory_space<vmem>>, vector<8x24xf32>
    %c0_6 = arith.constant 0 : index
    %c0_7 = arith.constant 0 : index
    %10 = vector.load %arg4[%c0_6, %c0_7] : memref<8x24xf32, #tpu.memory_space<vmem>>, vector<8x24xf32>
    %c0_8 = arith.constant 0 : index
    %c0_9 = arith.constant 0 : index
    %11 = vector.load %arg2[%c0_8, %c0_9] : memref<8x1xf32, #tpu.memory_space<vmem>>, vector<8x1xf32>
    %c0_10 = arith.constant 0 : index
    %c0_11 = arith.constant 0 : index
    %12 = vector.load %arg3[%c0_10, %c0_11] : memref<8x1xf32, #tpu.memory_space<vmem>>, vector<8x1xf32>
    %c0_12 = arith.constant 0 : index
    %c0_13 = arith.constant 0 : index
    %13 = vector.load %arg5[%c0_12, %c0_13] : memref<8x1xf32, #tpu.memory_space<vmem>>, vector<8x1xf32>
    %c0_14 = arith.constant 0 : index
    %c0_15 = arith.constant 0 : index
    %14 = vector.load %arg6[%c0_14, %c0_15] : memref<8x1xf32, #tpu.memory_space<vmem>>, vector<8x1xf32>
    %c1_i32 = arith.constant 1 : i32
    %15 = tpu.dynamic_rotate %6 by %c1_i32 dim 1 : vector<8x16xf32>, i32 -> vector<8x16xf32>
    %cst = arith.constant 0.000000e+00 : f32
    %16 = vector.shape_cast %2 : vector<1x16xi1> to vector<1x16xi1>
    %17 = vector.broadcast %16 : vector<1x16xi1> to vector<8x16xi1>
    %18 = vector.broadcast %cst : f32 to vector<8x16xf32>
    %19 = arith.select %17, %18, %15 : vector<8x16xi1>, vector<8x16xf32>
    %c15_i32_16 = arith.constant 15 : i32
    %20 = tpu.dynamic_rotate %6 by %c15_i32_16 dim 1 : vector<8x16xf32>, i32 -> vector<8x16xf32>
    %cst_17 = arith.constant 0.000000e+00 : f32
    %21 = vector.shape_cast %4 : vector<1x16xi1> to vector<1x16xi1>
    %22 = vector.broadcast %21 : vector<1x16xi1> to vector<8x16xi1>
    %23 = vector.broadcast %cst_17 : f32 to vector<8x16xf32>
    %24 = arith.select %22, %23, %20 : vector<8x16xi1>, vector<8x16xf32>
    %25 = tpu.concatenate %19, %6, %24 in 0 : vector<8x16xf32>, vector<8x16xf32>, vector<8x16xf32> -> vector<24x16xf32>
    %cst_18 = arith.constant dense<0.000000e+00> : vector<8x16xf32>
    %26 = tpu.matmul %9, %25, %cst_18 {dimension_numbers = #tpu.dot_dimension_numbers<[1], [0], [0], [1], [0, 0, 1, 1], [], []>} : vector<8x24xf32>, vector<24x16xf32>, vector<8x16xf32> -> vector<8x16xf32>
    %c1_i32_19 = arith.constant 1 : i32
    %27 = tpu.dynamic_rotate %8 by %c1_i32_19 dim 1 : vector<8x16xf32>, i32 -> vector<8x16xf32>
    %cst_20 = arith.constant 0.000000e+00 : f32
    %28 = vector.shape_cast %2 : vector<1x16xi1> to vector<1x16xi1>
    %29 = vector.broadcast %28 : vector<1x16xi1> to vector<8x16xi1>
    %30 = vector.broadcast %cst_20 : f32 to vector<8x16xf32>
    %31 = arith.select %29, %30, %27 : vector<8x16xi1>, vector<8x16xf32>
    %c15_i32_21 = arith.constant 15 : i32
    %32 = tpu.dynamic_rotate %8 by %c15_i32_21 dim 1 : vector<8x16xf32>, i32 -> vector<8x16xf32>
    %cst_22 = arith.constant 0.000000e+00 : f32
    %33 = vector.shape_cast %4 : vector<1x16xi1> to vector<1x16xi1>
    %34 = vector.broadcast %33 : vector<1x16xi1> to vector<8x16xi1>
    %35 = vector.broadcast %cst_22 : f32 to vector<8x16xf32>
    %36 = arith.select %34, %35, %32 : vector<8x16xi1>, vector<8x16xf32>
    %37 = tpu.concatenate %31, %8, %36 in 0 : vector<8x16xf32>, vector<8x16xf32>, vector<8x16xf32> -> vector<24x16xf32>
    %cst_23 = arith.constant dense<0.000000e+00> : vector<8x16xf32>
    %38 = tpu.matmul %9, %37, %cst_23 {dimension_numbers = #tpu.dot_dimension_numbers<[1], [0], [0], [1], [0, 0, 1, 1], [], []>} : vector<8x24xf32>, vector<24x16xf32>, vector<8x16xf32> -> vector<8x16xf32>
    %39 = arith.mulf %26, %26 : vector<8x16xf32>
    %40 = arith.addf %26, %38 : vector<8x16xf32>
    %41 = arith.mulf %38, %38 : vector<8x16xf32>
    %42 = arith.addf %39, %41 : vector<8x16xf32>
    %cst_24 = arith.constant dense<0.000000e+00> : vector<8xf32>
    %43 = vector.multi_reduction <add>, %40, %cst_24 [1] : vector<8x16xf32> to vector<8xf32>
    %44 = vector.shape_cast %43 : vector<8xf32> to vector<8x1xf32>
    %cst_25 = arith.constant dense<0.000000e+00> : vector<8xf32>
    %45 = vector.multi_reduction <add>, %42, %cst_25 [1] : vector<8x16xf32> to vector<8xf32>
    %46 = vector.shape_cast %45 : vector<8xf32> to vector<8x1xf32>
    %cst_26 = arith.constant 3.125000e-02 : f32
    %47 = vector.broadcast %cst_26 : f32 to vector<8x1xf32>
    %48 = arith.mulf %44, %47 : vector<8x1xf32>
    %cst_27 = arith.constant 3.125000e-02 : f32
    %49 = vector.broadcast %cst_27 : f32 to vector<8x1xf32>
    %50 = arith.mulf %46, %49 : vector<8x1xf32>
    %51 = arith.mulf %48, %48 : vector<8x1xf32>
    %52 = arith.subf %50, %51 : vector<8x1xf32>
    %cst_28 = arith.constant 9.99999974E-6 : f32
    %53 = vector.broadcast %cst_28 : f32 to vector<8x1xf32>
    %54 = arith.addf %52, %53 : vector<8x1xf32>
    %55 = math.rsqrt %54 : vector<8x1xf32>
    %56 = arith.mulf %11, %55 : vector<8x1xf32>
    %57 = arith.mulf %48, %56 : vector<8x1xf32>
    %58 = arith.subf %12, %57 : vector<8x1xf32>
    %59 = vector.broadcast %56 : vector<8x1xf32> to vector<8x16xf32>
    %60 = arith.mulf %26, %59 : vector<8x16xf32>
    %61 = vector.broadcast %58 : vector<8x1xf32> to vector<8x16xf32>
    %62 = arith.addf %60, %61 : vector<8x16xf32>
    %63 = vector.broadcast %56 : vector<8x1xf32> to vector<8x16xf32>
    %64 = arith.mulf %38, %63 : vector<8x16xf32>
    %65 = vector.broadcast %58 : vector<8x1xf32> to vector<8x16xf32>
    %66 = arith.addf %64, %65 : vector<8x16xf32>
    %cst_29 = arith.constant 0.000000e+00 : f32
    %67 = vector.broadcast %cst_29 : f32 to vector<8x16xf32>
    %68 = arith.maximumf %62, %67 : vector<8x16xf32>
    %cst_30 = arith.constant 0.000000e+00 : f32
    %69 = vector.broadcast %cst_30 : f32 to vector<8x16xf32>
    %70 = arith.maximumf %66, %69 : vector<8x16xf32>
    %c1_i32_31 = arith.constant 1 : i32
    %71 = tpu.dynamic_rotate %68 by %c1_i32_31 dim 1 : vector<8x16xf32>, i32 -> vector<8x16xf32>
    %cst_32 = arith.constant 0.000000e+00 : f32
    %72 = vector.shape_cast %2 : vector<1x16xi1> to vector<1x16xi1>
    %73 = vector.broadcast %72 : vector<1x16xi1> to vector<8x16xi1>
    %74 = vector.broadcast %cst_32 : f32 to vector<8x16xf32>
    %75 = arith.select %73, %74, %71 : vector<8x16xi1>, vector<8x16xf32>
    %c15_i32_33 = arith.constant 15 : i32
    %76 = tpu.dynamic_rotate %68 by %c15_i32_33 dim 1 : vector<8x16xf32>, i32 -> vector<8x16xf32>
    %cst_34 = arith.constant 0.000000e+00 : f32
    %77 = vector.shape_cast %4 : vector<1x16xi1> to vector<1x16xi1>
    %78 = vector.broadcast %77 : vector<1x16xi1> to vector<8x16xi1>
    %79 = vector.broadcast %cst_34 : f32 to vector<8x16xf32>
    %80 = arith.select %78, %79, %76 : vector<8x16xi1>, vector<8x16xf32>
    %81 = tpu.concatenate %75, %68, %80 in 0 : vector<8x16xf32>, vector<8x16xf32>, vector<8x16xf32> -> vector<24x16xf32>
    %cst_35 = arith.constant dense<0.000000e+00> : vector<8x16xf32>
    %82 = tpu.matmul %10, %81, %cst_35 {dimension_numbers = #tpu.dot_dimension_numbers<[1], [0], [0], [1], [0, 0, 1, 1], [], []>} : vector<8x24xf32>, vector<24x16xf32>, vector<8x16xf32> -> vector<8x16xf32>
    %c1_i32_36 = arith.constant 1 : i32
    %83 = tpu.dynamic_rotate %70 by %c1_i32_36 dim 1 : vector<8x16xf32>, i32 -> vector<8x16xf32>
    %cst_37 = arith.constant 0.000000e+00 : f32
    %84 = vector.shape_cast %2 : vector<1x16xi1> to vector<1x16xi1>
    %85 = vector.broadcast %84 : vector<1x16xi1> to vector<8x16xi1>
    %86 = vector.broadcast %cst_37 : f32 to vector<8x16xf32>
    %87 = arith.select %85, %86, %83 : vector<8x16xi1>, vector<8x16xf32>
    %c15_i32_38 = arith.constant 15 : i32
    %88 = tpu.dynamic_rotate %70 by %c15_i32_38 dim 1 : vector<8x16xf32>, i32 -> vector<8x16xf32>
    %cst_39 = arith.constant 0.000000e+00 : f32
    %89 = vector.shape_cast %4 : vector<1x16xi1> to vector<1x16xi1>
    %90 = vector.broadcast %89 : vector<1x16xi1> to vector<8x16xi1>
    %91 = vector.broadcast %cst_39 : f32 to vector<8x16xf32>
    %92 = arith.select %90, %91, %88 : vector<8x16xi1>, vector<8x16xf32>
    %93 = tpu.concatenate %87, %70, %92 in 0 : vector<8x16xf32>, vector<8x16xf32>, vector<8x16xf32> -> vector<24x16xf32>
    %cst_40 = arith.constant dense<0.000000e+00> : vector<8x16xf32>
    %94 = tpu.matmul %10, %93, %cst_40 {dimension_numbers = #tpu.dot_dimension_numbers<[1], [0], [0], [1], [0, 0, 1, 1], [], []>} : vector<8x24xf32>, vector<24x16xf32>, vector<8x16xf32> -> vector<8x16xf32>
    %95 = arith.mulf %82, %82 : vector<8x16xf32>
    %96 = arith.addf %82, %94 : vector<8x16xf32>
    %97 = arith.mulf %94, %94 : vector<8x16xf32>
    %98 = arith.addf %95, %97 : vector<8x16xf32>
    %cst_41 = arith.constant dense<0.000000e+00> : vector<8xf32>
    %99 = vector.multi_reduction <add>, %96, %cst_41 [1] : vector<8x16xf32> to vector<8xf32>
    %100 = vector.shape_cast %99 : vector<8xf32> to vector<8x1xf32>
    %cst_42 = arith.constant dense<0.000000e+00> : vector<8xf32>
    %101 = vector.multi_reduction <add>, %98, %cst_42 [1] : vector<8x16xf32> to vector<8xf32>
    %102 = vector.shape_cast %101 : vector<8xf32> to vector<8x1xf32>
    %cst_43 = arith.constant 3.125000e-02 : f32
    %103 = vector.broadcast %cst_43 : f32 to vector<8x1xf32>
    %104 = arith.mulf %100, %103 : vector<8x1xf32>
    %cst_44 = arith.constant 3.125000e-02 : f32
    %105 = vector.broadcast %cst_44 : f32 to vector<8x1xf32>
    %106 = arith.mulf %102, %105 : vector<8x1xf32>
    %107 = arith.mulf %104, %104 : vector<8x1xf32>
    %108 = arith.subf %106, %107 : vector<8x1xf32>
    %cst_45 = arith.constant 9.99999974E-6 : f32
    %109 = vector.broadcast %cst_45 : f32 to vector<8x1xf32>
    %110 = arith.addf %108, %109 : vector<8x1xf32>
    %111 = math.rsqrt %110 : vector<8x1xf32>
    %112 = arith.mulf %13, %111 : vector<8x1xf32>
    %113 = arith.mulf %104, %112 : vector<8x1xf32>
    %114 = arith.subf %14, %113 : vector<8x1xf32>
    %115 = vector.broadcast %112 : vector<8x1xf32> to vector<8x16xf32>
    %116 = arith.mulf %82, %115 : vector<8x16xf32>
    %117 = vector.broadcast %114 : vector<8x1xf32> to vector<8x16xf32>
    %118 = arith.addf %116, %117 : vector<8x16xf32>
    %119 = vector.broadcast %112 : vector<8x1xf32> to vector<8x16xf32>
    %120 = arith.mulf %94, %119 : vector<8x16xf32>
    %121 = vector.broadcast %114 : vector<8x1xf32> to vector<8x16xf32>
    %122 = arith.addf %120, %121 : vector<8x16xf32>
    %123 = arith.addf %118, %6 : vector<8x16xf32>
    %cst_46 = arith.constant 0.000000e+00 : f32
    %124 = vector.broadcast %cst_46 : f32 to vector<8x16xf32>
    %125 = arith.maximumf %123, %124 : vector<8x16xf32>
    %c0_47 = arith.constant 0 : index
    %c0_48 = arith.constant 0 : index
    %c0_49 = arith.constant 0 : index
    %126 = vector.load %arg7[%c0_47, %c0_48, %c0_49] : memref<2x8x16xf32, #tpu.memory_space<vmem>>, vector<1x8x16xf32>
    %127 = vector.shape_cast %126 : vector<1x8x16xf32> to vector<8x16xf32>
    %128 = vector.shape_cast %125 : vector<8x16xf32> to vector<1x8x16xf32>
    tpu.vector_store %arg7[%c0_47, %c0_48, %c0_49], %128 {strides = array<i32>} : memref<2x8x16xf32, #tpu.memory_space<vmem>>, vector<1x8x16xf32>,
    %129 = arith.addf %122, %8 : vector<8x16xf32>
    %cst_50 = arith.constant 0.000000e+00 : f32
    %130 = vector.broadcast %cst_50 : f32 to vector<8x16xf32>
    %131 = arith.maximumf %129, %130 : vector<8x16xf32>
    %c1_51 = arith.constant 1 : index
    %c0_52 = arith.constant 0 : index
    %c0_53 = arith.constant 0 : index
    %132 = vector.load %arg7[%c1_51, %c0_52, %c0_53] : memref<2x8x16xf32, #tpu.memory_space<vmem>>, vector<1x8x16xf32>
    %133 = vector.shape_cast %132 : vector<1x8x16xf32> to vector<8x16xf32>
    %134 = vector.shape_cast %131 : vector<8x16xf32> to vector<1x8x16xf32>
    tpu.vector_store %arg7[%c1_51, %c0_52, %c0_53], %134 {strides = array<i32>} : memref<2x8x16xf32, #tpu.memory_space<vmem>>, vector<1x8x16xf32>,
    return
  }
}

</mosaic_0001>

<llo_original>
// kernel: residual_block.1
$region0: #{residual_block.1}
  #allocation0 [shape = 'u32[]', space=smem, size = 0x4, offset = 0x4, fixed_abs, tag = 'smem constant byte address 0x4 - core index']
  #allocation1 [shape = 'u32[144,128]{1,0:T(1,128)}', space=vmem, size = 0x12000, scoped, tag = 'internal scratch']
  %s0 = inlined_call_operand.vmem [shape: f32[2,8,16], index: 0, kind: input, shape index: {}]
  %s1 = inlined_call_operand.vmem [shape: f32[8,24], index: 1, kind: input, shape index: {}]
  %s2 = inlined_call_operand.vmem [shape: f32[8,1], index: 2, kind: input, shape index: {}]
  %s3 = inlined_call_operand.vmem [shape: f32[8,1], index: 3, kind: input, shape index: {}]
  %s4 = inlined_call_operand.vmem [shape: f32[8,24], index: 4, kind: input, shape index: {}]
  %s5 = inlined_call_operand.vmem [shape: f32[8,1], index: 5, kind: input, shape index: {}]
  %s6 = inlined_call_operand.vmem [shape: f32[8,1], index: 6, kind: input, shape index: {}]
  %s7 = inlined_call_operand.hbm [shape: f32[2,8,16], index: 7, kind: output, shape index: {}]
  %s8 = sld [smem:[#allocation0]]
  $region38: #{residual_block.1} parent=0
    _
  %s10 = ssub.s32 1, %s8
  %s11 = scalar_select 0, %s10, %s8
  $region1: #{residual_block.1} parent=0
    #allocation2 [shape = 'u8[8192]{0}', space=vmem, size = 0x2000, scoped, tag = 'output window, operand 0, single buffered']
    #allocation3 [shape = 's32[1]{0}', space=sflag, size = 0x4, scoped, tag = 'scoped memory for residual_block.1']
    %12 = vsyncpa [#allocation3], 0
    // Predicated region
    $region2: #{residual_block.1} parent=1 // pred_check
      _
    $region3: #{residual_block.1} parent=1 // pred_check_branch
      %14 = sbr.rel (0) target = $region5
    $region4: #{residual_block.1} parent=1 // pred_region
      _
    $region5: #{residual_block.1} parent=1 // pred_fallthru
      _
    // Predicated region
    $region6: #{residual_block.1} parent=1 // pred_check
      _
    $region7: #{residual_block.1} parent=1 // pred_check_branch
      %16 = sbr.rel (0) target = $region9
    $region8: #{residual_block.1} parent=1 // pred_region
      _
    $region9: #{residual_block.1} parent=1 // pred_fallthru
      _
    // Predicated region
    $region10: #{residual_block.1} parent=1 // pred_check
      _
    $region11: #{residual_block.1} parent=1 // pred_check_branch
      %18 = sbr.rel (0) target = $region13
    $region12: #{residual_block.1} parent=1 // pred_region
      _
    $region13: #{residual_block.1} parent=1 // pred_fallthru
      _
    // Predicated region
    $region14: #{residual_block.1} parent=1 // pred_check
      _
    $region15: #{residual_block.1} parent=1 // pred_check_branch
      %20 = sbr.rel (0) target = $region17
    $region16: #{residual_block.1} parent=1 // pred_region
      _
    $region17: #{residual_block.1} parent=1 // pred_fallthru
      _
    // Predicated region
    $region18: #{residual_block.1} parent=1 // pred_check
      _
    $region19: #{residual_block.1} parent=1 // pred_check_branch
      %22 = sbr.rel (0) target = $region21
    $region20: #{residual_block.1} parent=1 // pred_region
      _
    $region21: #{residual_block.1} parent=1 // pred_fallthru
      _
    // Predicated region
    $region22: #{residual_block.1} parent=1 // pred_check
      _
    $region23: #{residual_block.1} parent=1 // pred_check_branch
      %24 = sbr.rel (0) target = $region25
    $region24: #{residual_block.1} parent=1 // pred_region
      _
    $region25: #{residual_block.1} parent=1 // pred_fallthru
      _
    // Predicated region
    $region26: #{residual_block.1} parent=1 // pred_check
      _
    $region27: #{residual_block.1} parent=1 // pred_check_branch
      %26 = sbr.rel (0) target = $region29
    $region28: #{residual_block.1} parent=1 // pred_region
      _
    $region29: #{residual_block.1} parent=1 // pred_fallthru
      _
    %v27 = vlaneseq
    %v28 = vand.u32 %v27, 127
    %vm29 = vcmp.eq.s32.totalorder %v28, 0
    %vm30 = vcmp.eq.s32.totalorder %v28, 15
    %v31 = vld [vmem:[%s0] sm:$0xff]
    %s32 = scalar_lea.vmem %s0, 8
    %v33 = vld [vmem:[%s32] sm:$0xff]
    %v34 = vld [vmem:[%s1] sm:$0xff]
    %v35 = vld [vmem:[%s4] sm:$0xff]
    %v36 = vld [vmem:[%s2] sm:$0xff]
    %v37 = vld [vmem:[%s3] sm:$0xff]
    %v38 = vld [vmem:[%s5] sm:$0xff]
    %v39 = vld [vmem:[%s6] sm:$0xff]
    %vm40 = vcmask 1047680
    %41 = vrot.lane.b32.xlu0 %v31, 16
    %v42 = vpop.permute.xlu0 %41
    %v43 = vsel %vm40, %v42, %v31
    %44 = vrot.lane.b32.xlu0 %v43, 16
    %v45 = vpop.permute.xlu0 %44
    %v46 = vsel %vm40, %v45, %v31
    %v47 = vsel %vm29, 1, 0
    %vm48 = vcmp.eq.s32.totalorder %v47, 1
    %50 = vrot.lane.b32.xlu0 %v46, 113
    %v51 = vpop.permute.xlu0 %50
    %v53 = vsel %vm48, 0.0, %v51
    %v54 = vsel %vm30, 1, 0
    %vm55 = vcmp.eq.s32.totalorder %v54, 1
    %56 = vrot.lane.b32.xlu0 %v46, 127
    %v57 = vpop.permute.xlu0 %56
    %v59 = vsel %vm55, 0.0, %v57
    %vm60 = vcmask 195584
    %v62 = vsel %vm60, %v34, 0
    %64 = vmatprep.subr.mxu0 0.0
    %65 = vmatpush1.msra.mxu0 %v53
    %66 = vmatprep.subr.mxu0 0.0
    %67 = vmatpush1.msra.mxu0 %v31
    %68 = vmatprep.subr.mxu0 0.0
    %69 = vmatpush1.msra.mxu0 %v59
    %70 = vmatprep.subr.mxu0 0.0
    %71 = vmatpush1.msra.mxu0 0.0
    %72 = vmatprep.subr.mxu0 0.0
    %73 = vmatpush1.msra.mxu0 0.0
    %74 = vmatprep.subr.mxu0 0.0
    %75 = vmatpush1.msra.mxu0 0.0
    %76 = vmatprep.subr.mxu0 0.0
    %77 = vmatpush1.msra.mxu0 0.0
    %78 = vmatprep.subr.mxu0 0.0
    %79 = vmatpush1.msra.mxu0 0.0
    %80 = vmatprep.subr.mxu0 0.0
    %81 = vmatpush1.msra.mxu0 0.0
    %82 = vmatprep.subr.mxu0 0.0
    %83 = vmatpush1.msra.mxu0 0.0
    %84 = vmatprep.subr.mxu0 0.0
    %85 = vmatpush1.msra.mxu0 0.0
    %86 = vmatprep.subr.mxu0 0.0
    %87 = vmatpush1.msra.mxu0 0.0
    %88 = vmatprep.subr.mxu0 0.0
    %89 = vmatpush1.msra.mxu0 0.0
    %90 = vmatprep.subr.mxu0 0.0
    %91 = vmatpush1.msra.mxu0 0.0
    %92 = vmatprep.subr.mxu0 0.0
    %93 = vmatpush1.msra.mxu0 0.0
    %94 = vmatprep.subr.mxu0 0.0
    %95 = vmatpush1.msra.mxu0 0.0
    %96 = vmatprep.subr.mxu0 0.0
    %97 = vmatpush1.msra.mxu0 0.0
    %98 = vmatprep.subr.mxu0 0.0
    %99 = vmatpush1.msra.mxu0 0.0
    %100 = vmatprep.subr.mxu0 0.0
    %101 = vmatpush1.msra.mxu0 0.0
    %102 = vmatprep.subr.mxu0 0.0
    %103 = vmatpush1.msra.mxu0 0.0
    %104 = vmatprep.subr.mxu0 0.0
    %105 = vmatpush1.msra.mxu0 0.0
    %106 = vmatprep.subr.mxu0 0.0
    %107 = vmatpush1.msra.mxu0 0.0
    %108 = vmatprep.subr.mxu0 0.0
    %109 = vmatpush1.msra.mxu0 0.0
    %110 = vmatprep.subr.mxu0 0.0
    %111 = vmatpush1.msra.mxu0 0.0
    %112 = vmatprep.subr.mxu0 0.0
    %113 = vmatpush1.msra.mxu0 0.0
    %114 = vmatprep.subr.mxu0 0.0
    %115 = vmatpush1.msra.mxu0 0.0
    %116 = vmatprep.subr.mxu0 0.0
    %117 = vmatpush1.msra.mxu0 0.0
    %118 = vmatprep.subr.mxu0 0.0
    %119 = vmatpush1.msra.mxu0 0.0
    %120 = vmatprep.subr.mxu0 0.0
    %121 = vmatpush1.msra.mxu0 0.0
    %122 = vmatprep.subr.mxu0 0.0
    %123 = vmatpush1.msra.mxu0 0.0
    %124 = vmatprep.subr.mxu0 0.0
    %125 = vmatpush1.msra.mxu0 0.0
    %126 = vmatprep.subr.mxu0 0.0
    %127 = vmatpush1.msra.mxu0 0.0
    %128 = vmatprep.mubr.f32.mxu0 0.0
    %129 = vmatmul.mubr.f32.gmra.mrb[0].mxu0 %v62
    %v130 = vpop.f32.mrb[0].mxu0
    %v131 = vadd.f32 0.0, %v130
    %v132 = vpop.f32.mrb[0].mxu0
    %133 = vdwg.mxu0
    %134 = vrot.lane.b32.xlu0 %v33, 16
    %v135 = vpop.permute.xlu0 %134
    %v136 = vsel %vm40, %v135, %v33
    %137 = vrot.lane.b32.xlu0 %v136, 16
    %v138 = vpop.permute.xlu0 %137
    %v139 = vsel %vm40, %v138, %v33
    %141 = vrot.lane.b32.xlu0 %v139, 113
    %v142 = vpop.permute.xlu0 %141
    %v144 = vsel %vm48, 0.0, %v142
    %145 = vrot.lane.b32.xlu0 %v139, 127
    %v146 = vpop.permute.xlu0 %145
    %v148 = vsel %vm55, 0.0, %v146
    %149 = vmatprep.subr.mxu0 0.0
    %150 = vmatpush1.msra.mxu0 %v144
    %151 = vmatprep.subr.mxu0 0.0
    %152 = vmatpush1.msra.mxu0 %v33
    %153 = vmatprep.subr.mxu0 0.0
    %154 = vmatpush1.msra.mxu0 %v148
    %155 = vmatprep.subr.mxu0 0.0
    %156 = vmatpush1.msra.mxu0 0.0
    %157 = vmatprep.subr.mxu0 0.0
    %158 = vmatpush1.msra.mxu0 0.0
    %159 = vmatprep.subr.mxu0 0.0
    %160 = vmatpush1.msra.mxu0 0.0
    %161 = vmatprep.subr.mxu0 0.0
    %162 = vmatpush1.msra.mxu0 0.0
    %163 = vmatprep.subr.mxu0 0.0
    %164 = vmatpush1.msra.mxu0 0.0
    %165 = vmatprep.subr.mxu0 0.0
    %166 = vmatpush1.msra.mxu0 0.0
    %167 = vmatprep.subr.mxu0 0.0
    %168 = vmatpush1.msra.mxu0 0.0
    %169 = vmatprep.subr.mxu0 0.0
    %170 = vmatpush1.msra.mxu0 0.0
    %171 = vmatprep.subr.mxu0 0.0
    %172 = vmatpush1.msra.mxu0 0.0
    %173 = vmatprep.subr.mxu0 0.0
    %174 = vmatpush1.msra.mxu0 0.0
    %175 = vmatprep.subr.mxu0 0.0
    %176 = vmatpush1.msra.mxu0 0.0
    %177 = vmatprep.subr.mxu0 0.0
    %178 = vmatpush1.msra.mxu0 0.0
    %179 = vmatprep.subr.mxu0 0.0
    %180 = vmatpush1.msra.mxu0 0.0
    %181 = vmatprep.subr.mxu0 0.0
    %182 = vmatpush1.msra.mxu0 0.0
    %183 = vmatprep.subr.mxu0 0.0
    %184 = vmatpush1.msra.mxu0 0.0
    %185 = vmatprep.subr.mxu0 0.0
    %186 = vmatpush1.msra.mxu0 0.0
    %187 = vmatprep.subr.mxu0 0.0
    %188 = vmatpush1.msra.mxu0 0.0
    %189 = vmatprep.subr.mxu0 0.0
    %190 = vmatpush1.msra.mxu0 0.0
    %191 = vmatprep.subr.mxu0 0.0
    %192 = vmatpush1.msra.mxu0 0.0
    %193 = vmatprep.subr.mxu0 0.0
    %194 = vmatpush1.msra.mxu0 0.0
    %195 = vmatprep.subr.mxu0 0.0
    %196 = vmatpush1.msra.mxu0 0.0
    %197 = vmatprep.subr.mxu0 0.0
    %198 = vmatpush1.msra.mxu0 0.0
    %199 = vmatprep.subr.mxu0 0.0
    %200 = vmatpush1.msra.mxu0 0.0
    %201 = vmatprep.subr.mxu0 0.0
    %202 = vmatpush1.msra.mxu0 0.0
    %203 = vmatprep.subr.mxu0 0.0
    %204 = vmatpush1.msra.mxu0 0.0
    %205 = vmatprep.subr.mxu0 0.0
    %206 = vmatpush1.msra.mxu0 0.0
    %207 = vmatprep.subr.mxu0 0.0
    %208 = vmatpush1.msra.mxu0 0.0
    %209 = vmatprep.subr.mxu0 0.0
    %210 = vmatpush1.msra.mxu0 0.0
    %211 = vmatprep.subr.mxu0 0.0
    %212 = vmatpush1.msra.mxu0 0.0
    %213 = vmatprep.mubr.f32.mxu0 0.0
    %214 = vmatmul.mubr.f32.gmra.mrb[0].mxu0 %v62
    %v215 = vpop.f32.mrb[0].mxu0
    %v216 = vadd.f32 0.0, %v215
    %v217 = vpop.f32.mrb[0].mxu0
    %218 = vdwg.mxu0
    %v219 = vmul.f32 %v131, %v131
    %v220 = vadd.f32 %v131, %v216
    %v221 = vmul.f32 %v216, %v216
    %v222 = vadd.f32 %v219, %v221
    %vm223 = vcmask 130048
    %v224 = vsel %vm223, %v220, 0.0
    %225 = vadd.xlane.f32.xlu0 %v224
    %v226 = vpop.xlane.xlu0 %225
    %v227 = vsel %vm223, %v222, 0.0
    %228 = vadd.xlane.f32.xlu0 %v227
    %v229 = vpop.xlane.xlu0 %228
    %v230 = vmul.f32 %v226, 0.03125
    %v231 = vmul.f32 %v229, 0.03125
    %v232 = vmul.f32 %v230, %v230
    %v233 = vsub.f32 %v231, %v232
    %v234 = vadd.f32 %v233, 1e-05
    %v235 = vrsqrt.pop %v234
    %v236 = vmul.f32 %v36, %v235
    %v237 = vmul.f32 %v230, %v236
    %v238 = vsub.f32 %v37, %v237
    %240 = vset.pattern.permute.xlu0 0
    %241 = vperm.xlu0 %240, %v236
    %v242 = vpop.permute.xlu0 %241
    %v244 = vmul.f32 %v131, %v242
    %246 = vset.pattern.permute.xlu0 0
    %247 = vperm.xlu0 %246, %v238
    %v248 = vpop.permute.xlu0 %247
    %v250 = vadd.f32 %v244, %v248
    %v251 = vmul.f32 %v216, %v242
    %v252 = vadd.f32 %v251, %v248
    %v253 = vmax.f32 %v250, 0.0
    %v254 = vmax.f32 %v252, 0.0
    %255 = vrot.lane.b32.xlu0 %v253, 16
    %v256 = vpop.permute.xlu0 %255
    %v257 = vsel %vm40, %v256, %v253
    %258 = vrot.lane.b32.xlu0 %v257, 16
    %v259 = vpop.permute.xlu0 %258
    %v260 = vsel %vm40, %v259, %v253
    %262 = vrot.lane.b32.xlu0 %v260, 113
    %v263 = vpop.permute.xlu0 %262
    %v265 = vsel %vm48, 0.0, %v263
    %266 = vrot.lane.b32.xlu0 %v260, 127
    %v267 = vpop.permute.xlu0 %266
    %v269 = vsel %vm55, 0.0, %v267
    %v271 = vsel %vm60, %v35, 0
    %273 = vmatprep.subr.mxu0 0.0
    %274 = vmatpush1.msra.mxu0 %v265
    %275 = vmatprep.subr.mxu0 0.0
    %276 = vmatpush1.msra.mxu0 %v253
    %277 = vmatprep.subr.mxu0 0.0
    %278 = vmatpush1.msra.mxu0 %v269
    %279 = vmatprep.subr.mxu0 0.0
    %280 = vmatpush1.msra.mxu0 0.0
    %281 = vmatprep.subr.mxu0 0.0
    %282 = vmatpush1.msra.mxu0 0.0
    %283 = vmatprep.subr.mxu0 0.0
    %284 = vmatpush1.msra.mxu0 0.0
    %285 = vmatprep.subr.mxu0 0.0
    %286 = vmatpush1.msra.mxu0 0.0
    %287 = vmatprep.subr.mxu0 0.0
    %288 = vmatpush1.msra.mxu0 0.0
    %289 = vmatprep.subr.mxu0 0.0
    %290 = vmatpush1.msra.mxu0 0.0
    %291 = vmatprep.subr.mxu0 0.0
    %292 = vmatpush1.msra.mxu0 0.0
    %293 = vmatprep.subr.mxu0 0.0
    %294 = vmatpush1.msra.mxu0 0.0
    %295 = vmatprep.subr.mxu0 0.0
    %296 = vmatpush1.msra.mxu0 0.0
    %297 = vmatprep.subr.mxu0 0.0
    %298 = vmatpush1.msra.mxu0 0.0
    %299 = vmatprep.subr.mxu0 0.0
    %300 = vmatpush1.msra.mxu0 0.0
    %301 = vmatprep.subr.mxu0 0.0
    %302 = vmatpush1.msra.mxu0 0.0
    %303 = vmatprep.subr.mxu0 0.0
    %304 = vmatpush1.msra.mxu0 0.0
    %305 = vmatprep.subr.mxu0 0.0
    %306 = vmatpush1.msra.mxu0 0.0
    %307 = vmatprep.subr.mxu0 0.0
    %308 = vmatpush1.msra.mxu0 0.0
    %309 = vmatprep.subr.mxu0 0.0
    %310 = vmatpush1.msra.mxu0 0.0
    %311 = vmatprep.subr.mxu0 0.0
    %312 = vmatpush1.msra.mxu0 0.0
    %313 = vmatprep.subr.mxu0 0.0
    %314 = vmatpush1.msra.mxu0 0.0
    %315 = vmatprep.subr.mxu0 0.0
    %316 = vmatpush1.msra.mxu0 0.0
    %317 = vmatprep.subr.mxu0 0.0
    %318 = vmatpush1.msra.mxu0 0.0
    %319 = vmatprep.subr.mxu0 0.0
    %320 = vmatpush1.msra.mxu0 0.0
    %321 = vmatprep.subr.mxu0 0.0
    %322 = vmatpush1.msra.mxu0 0.0
    %323 = vmatprep.subr.mxu0 0.0
    %324 = vmatpush1.msra.mxu0 0.0
    %325 = vmatprep.subr.mxu0 0.0
    %326 = vmatpush1.msra.mxu0 0.0
    %327 = vmatprep.subr.mxu0 0.0
    %328 = vmatpush1.msra.mxu0 0.0
    %329 = vmatprep.subr.mxu0 0.0
    %330 = vmatpush1.msra.mxu0 0.0
    %331 = vmatprep.subr.mxu0 0.0
    %332 = vmatpush1.msra.mxu0 0.0
    %333 = vmatprep.subr.mxu0 0.0
    %334 = vmatpush1.msra.mxu0 0.0
    %335 = vmatprep.subr.mxu0 0.0
    %336 = vmatpush1.msra.mxu0 0.0
    %337 = vmatprep.mubr.f32.mxu0 0.0
    %338 = vmatmul.mubr.f32.gmra.mrb[0].mxu0 %v271
    %v339 = vpop.f32.mrb[0].mxu0
    %v340 = vadd.f32 0.0, %v339
    %v341 = vpop.f32.mrb[0].mxu0
    %342 = vdwg.mxu0
    %343 = vrot.lane.b32.xlu0 %v254, 16
    %v344 = vpop.permute.xlu0 %343
    %v345 = vsel %vm40, %v344, %v254
    %346 = vrot.lane.b32.xlu0 %v345, 16
    %v347 = vpop.permute.xlu0 %346
    %v348 = vsel %vm40, %v347, %v254
    %350 = vrot.lane.b32.xlu0 %v348, 113
    %v351 = vpop.permute.xlu0 %350
    %v353 = vsel %vm48, 0.0, %v351
    %354 = vrot.lane.b32.xlu0 %v348, 127
    %v355 = vpop.permute.xlu0 %354
    %v357 = vsel %vm55, 0.0, %v355
    %358 = vmatprep.subr.mxu0 0.0
    %359 = vmatpush1.msra.mxu0 %v353
    %360 = vmatprep.subr.mxu0 0.0
    %361 = vmatpush1.msra.mxu0 %v254
    %362 = vmatprep.subr.mxu0 0.0
    %363 = vmatpush1.msra.mxu0 %v357
    %364 = vmatprep.subr.mxu0 0.0
    %365 = vmatpush1.msra.mxu0 0.0
    %366 = vmatprep.subr.mxu0 0.0
    %367 = vmatpush1.msra.mxu0 0.0
    %368 = vmatprep.subr.mxu0 0.0
    %369 = vmatpush1.msra.mxu0 0.0
    %370 = vmatprep.subr.mxu0 0.0
    %371 = vmatpush1.msra.mxu0 0.0
    %372 = vmatprep.subr.mxu0 0.0
    %373 = vmatpush1.msra.mxu0 0.0
    %374 = vmatprep.subr.mxu0 0.0
    %375 = vmatpush1.msra.mxu0 0.0
    %376 = vmatprep.subr.mxu0 0.0
    %377 = vmatpush1.msra.mxu0 0.0
    %378 = vmatprep.subr.mxu0 0.0
    %379 = vmatpush1.msra.mxu0 0.0
    %380 = vmatprep.subr.mxu0 0.0
    %381 = vmatpush1.msra.mxu0 0.0
    %382 = vmatprep.subr.mxu0 0.0
    %383 = vmatpush1.msra.mxu0 0.0
    %384 = vmatprep.subr.mxu0 0.0
    %385 = vmatpush1.msra.mxu0 0.0
    %386 = vmatprep.subr.mxu0 0.0
    %387 = vmatpush1.msra.mxu0 0.0
    %388 = vmatprep.subr.mxu0 0.0
    %389 = vmatpush1.msra.mxu0 0.0
    %390 = vmatprep.subr.mxu0 0.0
    %391 = vmatpush1.msra.mxu0 0.0
    %392 = vmatprep.subr.mxu0 0.0
    %393 = vmatpush1.msra.mxu0 0.0
    %394 = vmatprep.subr.mxu0 0.0
    %395 = vmatpush1.msra.mxu0 0.0
    %396 = vmatprep.subr.mxu0 0.0
    %397 = vmatpush1.msra.mxu0 0.0
    %398 = vmatprep.subr.mxu0 0.0
    %399 = vmatpush1.msra.mxu0 0.0
    %400 = vmatprep.subr.mxu0 0.0
    %401 = vmatpush1.msra.mxu0 0.0
    %402 = vmatprep.subr.mxu0 0.0
    %403 = vmatpush1.msra.mxu0 0.0
    %404 = vmatprep.subr.mxu0 0.0
    %405 = vmatpush1.msra.mxu0 0.0
    %406 = vmatprep.subr.mxu0 0.0
    %407 = vmatpush1.msra.mxu0 0.0
    %408 = vmatprep.subr.mxu0 0.0
    %409 = vmatpush1.msra.mxu0 0.0
    %410 = vmatprep.subr.mxu0 0.0
    %411 = vmatpush1.msra.mxu0 0.0
    %412 = vmatprep.subr.mxu0 0.0
    %413 = vmatpush1.msra.mxu0 0.0
    %414 = vmatprep.subr.mxu0 0.0
    %415 = vmatpush1.msra.mxu0 0.0
    %416 = vmatprep.subr.mxu0 0.0
    %417 = vmatpush1.msra.mxu0 0.0
    %418 = vmatprep.subr.mxu0 0.0
    %419 = vmatpush1.msra.mxu0 0.0
    %420 = vmatprep.subr.mxu0 0.0
    %421 = vmatpush1.msra.mxu0 0.0
    %422 = vmatprep.mubr.f32.mxu0 0.0
    %423 = vmatmul.mubr.f32.gmra.mrb[0].mxu0 %v271
    %v424 = vpop.f32.mrb[0].mxu0
    %v425 = vadd.f32 0.0, %v424
    %v426 = vpop.f32.mrb[0].mxu0
    %427 = vdwg.mxu0
    %v428 = vmul.f32 %v340, %v340
    %v429 = vadd.f32 %v340, %v425
    %v430 = vmul.f32 %v425, %v425
    %v431 = vadd.f32 %v428, %v430
    %v432 = vsel %vm223, %v429, 0.0
    %433 = vadd.xlane.f32.xlu0 %v432
    %v434 = vpop.xlane.xlu0 %433
    %v435 = vsel %vm223, %v431, 0.0
    %436 = vadd.xlane.f32.xlu0 %v435
    %v437 = vpop.xlane.xlu0 %436
    %v438 = vmul.f32 %v434, 0.03125
    %v439 = vmul.f32 %v437, 0.03125
    %v440 = vmul.f32 %v438, %v438
    %v441 = vsub.f32 %v439, %v440
    %v442 = vadd.f32 %v441, 1e-05
    %v443 = vrsqrt.pop %v442
    %v444 = vmul.f32 %v38, %v443
    %v445 = vmul.f32 %v438, %v444
    %v446 = vsub.f32 %v39, %v445
    %448 = vset.pattern.permute.xlu0 0
    %449 = vperm.xlu0 %448, %v444
    %v450 = vpop.permute.xlu0 %449
    %v452 = vmul.f32 %v340, %v450
    %454 = vset.pattern.permute.xlu0 0
    %455 = vperm.xlu0 %454, %v446
    %v456 = vpop.permute.xlu0 %455
    %v458 = vadd.f32 %v452, %v456
    %v459 = vmul.f32 %v425, %v450
    %v460 = vadd.f32 %v459, %v456
    %v461 = vadd.f32 %v458, %v31
    %v462 = vmax.f32 %v461, 0.0
    %463 = vst.msk [vmem:[#allocation2] sm:$0xff] %vm223, %v462
    %v464 = vadd.f32 %v460, %v33
    %v465 = vmax.f32 %v464, 0.0
    %s466 = scalar_lea.vmem [#allocation2], 8
    %467 = vst.msk [vmem:[%s466] sm:$0xff] %vm223, %v465
    // Predicated region
    $region30: #{residual_block.1} parent=1 // pred_check
      _
    $region31: #{residual_block.1} parent=1 // pred_check_branch
      %469 = sbr.rel (0) target = $region33
    $region32: #{residual_block.1} parent=1 // pred_region
      %s471 = ssub.s32 256, 256
      %472 = vsyncadd [#allocation3], %s471
      %s473 = sshll.u32 [#allocation2], 4
      %s474 = int_to_ptr.vmem [resolvable:$true] %s473
      %479 = dma.vmem_to_hbm [thread:$0]  %s474, 256, %s7, [#allocation3], 128, 128, 8
    $region33: #{residual_block.1} parent=1 // pred_fallthru
      _
    // Predicated region
    $region34: #{residual_block.1} parent=1 // pred_check
      _
    $region35: #{residual_block.1} parent=1 // pred_check_branch
      %481 = sbr.rel (0) target = $region37
    $region36: #{residual_block.1} parent=1 // pred_region
      %482 = dma.done [#allocation3], 256
    $region37: #{residual_block.1} parent=1 // pred_fallthru
      _
    %483 = vsyncpa [#allocation3], 1

</llo_original>
